<compile_context>
chip_gen: v5e
topology: v5e:2x2
jax: 0.10.0
libtpu: 0.0.40
codegen_flags: <defaults>
</compile_context>

<pallas_src>
import math
import functools

import jax
import jax.numpy as jnp
from jax import lax
from jax.experimental import pallas as pl
from jax.experimental.pallas import tpu as pltpu


# --------------------------------------------------------------------------------------
# Kernel
# --------------------------------------------------------------------------------------
def _mhsa_kernel(x_q_ref, x_kv_ref, wq_ref, bq_ref, wkv_ref, bkv_ref, wo_ref, bo_ref,
                 o_ref, *, head_dim, heads_per_block):
    D = head_dim
    Hb = heads_per_block
    h = pl.program_id(2)                      # head-block index (reduction axis, innermost)

    x_q = x_q_ref[0]                          # (Tq, C) bf16  : query rows of this tile
    x_kv = x_kv_ref[0]                        # (N,  C) bf16  : full sequence for K/V

    # Initialize the resident output block with the output-projection bias at h == 0.
    @pl.when(h == 0)
    def _():
        o_ref[0] = jnp.broadcast_to(bo_ref[...], o_ref.shape[1:]).astype(o_ref.dtype)

    # Fused projections for this head block.  The 1/sqrt(D) score scale is already folded
    # into wq/bq at pack time, so no per-score multiply is needed below.
    q = jnp.dot(x_q, wq_ref[0], preferred_element_type=jnp.float32) + bq_ref[0]     # (Tq, Hb*D) f32
    kv = jnp.dot(x_kv, wkv_ref[0], preferred_element_type=jnp.float32) + bkv_ref[0]  # (N, Hb*2D) f32

    q_bf = q.astype(jnp.bfloat16)
    k_bf = kv[:, :Hb * D].astype(jnp.bfloat16)      # [K_h0 | K_h1 | ...]
    v_bf = kv[:, Hb * D:].astype(jnp.bfloat16)      # [V_h0 | V_h1 | ...]
    wo = wo_ref[0]                                   # (Hb*D, C) bf16

    Tq = x_q.shape[0]
    C = wo.shape[-1]
    contrib = jnp.zeros((Tq, C), jnp.float32)

    # Static unroll over the heads of this block (Hb is small: 1 or 2).
    for i in range(Hb):
        qi = q_bf[:, i * D:(i + 1) * D]
        ki = k_bf[:, i * D:(i + 1) * D]
        vi = v_bf[:, i * D:(i + 1) * D]

        # scores: contract last dims of q and k -> no explicit transpose before the MXU
        s = lax.dot_general(qi, ki, (((1,), (1,)), ((), ())),
                            preferred_element_type=jnp.float32)          # (Tq, N) f32

        # numerically-stable softmax, normalization deferred past the PV matmul
        m = jnp.max(s, axis=-1, keepdims=True)
        e = jnp.exp(s - m)                                               # (Tq, N) f32
        denom = jnp.sum(e, axis=-1, keepdims=True)                       # (Tq, 1) f32

        # TODO(synk): dropout on attention probabilities omitted (dropout=0.0 / eval mode).

        attn = jnp.dot(e.astype(jnp.bfloat16), vi,
                       preferred_element_type=jnp.float32)               # (Tq, D) f32
        attn = attn * pl.reciprocal(denom, approx=True)                  # deferred normalize

        # fold this head's slice of the output projection into the per-step contribution
        contrib = contrib + jnp.dot(attn.astype(jnp.bfloat16), wo[i * D:(i + 1) * D, :],
                                    preferred_element_type=jnp.float32)  # (Tq, C) f32

    # Accumulate directly into the output block (resident across the head axis).
    o_ref[0] += contrib.astype(o_ref.dtype)


# --------------------------------------------------------------------------------------
# Parameter packing (call ONCE at parameter-load time, not per forward call)
# --------------------------------------------------------------------------------------
def pack_mhsa_params(params, num_heads, heads_per_block=None):
    """Re-layout weights for the kernel: per-head-block fused Q / K|V / Wo blocks, bf16.

    The 1/sqrt(head_dim) attention scale is folded into wq / bq here.
    """
    C = params["wq"].shape[0]
    H = num_heads
    D = C // H
    if heads_per_block is None:
        heads_per_block = 2 if (H % 2 == 0 and D < 128) else 1
    Hb = heads_per_block
    assert H % Hb == 0
    G = H // Hb
    bf = jnp.bfloat16
    scale = 1.0 / math.sqrt(D)

    def per_block_w(w):                      # (C, H*D) -> (G, C, Hb*D), heads contiguous
        return w.reshape(C, G, Hb * D).transpose(1, 0, 2)

    def per_block_b(b):                      # (1, H*D) -> (G, 1, Hb*D)
        return b[0].reshape(G, Hb * D)[:, None, :]

    wq = (per_block_w(params["wq"]) * scale).astype(bf)                       # (G, C, Hb*D)
    bq = (per_block_b(params["bq"]) * scale).astype(jnp.float32)              # (G, 1, Hb*D)
    wkv = jnp.concatenate([per_block_w(params["wk"]),
                           per_block_w(params["wv"])], axis=-1).astype(bf)     # (G, C, Hb*2D)
    bkv = jnp.concatenate([per_block_b(params["bk"]),
                           per_block_b(params["bv"])], axis=-1).astype(jnp.float32)
    wo = params["wo"].reshape(G, Hb * D, C).astype(bf)                         # (G, Hb*D, C)
    bo = params["bo"].astype(jnp.float32)                                      # (1, C)

    return dict(wq=wq, bq=bq, wkv=wkv, bkv=bkv, wo=wo, bo=bo,
                num_heads=H, heads_per_block=Hb, head_dim=D)


# --------------------------------------------------------------------------------------
# Wrapper
# --------------------------------------------------------------------------------------
def _pick_q_tile(N, max_tile=512):
    """Largest query tile <= max_tile that divides N (multiple of 8), else full N."""
    if N <= max_tile:
        return N
    t = max_tile - (max_tile % 8)
    while t >= 8:
        if N % t == 0:
            return t
        t -= 8
    return N


def _vmem_limit_bytes(N, Tq, C, D, Hb):
    """Estimate resident VMEM (double-buffered blocks + in-kernel temporaries) + headroom."""
    bf, f4, db = 2, 4, 2
    blocks = db * (Tq * C * bf            # x query tile
                   + N * C * bf           # x full (K/V)
                   + C * Hb * D * bf + Hb * D * f4        # wq, bq
                   + C * 2 * Hb * D * bf + 2 * Hb * D * f4  # wkv, bkv
                   + Hb * D * C * bf + C * f4             # wo, bo
                   + Tq * C * f4)         # output block
    interm = ((Tq * Hb * D + N * 2 * Hb * D) * f4        # q, kv f32
              + Tq * N * (2 * f4 + bf)                    # scores, exp, bf16 exp
              + Tq * D * f4 + Tq * C * f4)                # attn, contrib
    est = int((blocks + interm) * 1.25) + (2 << 20)
    try:
        cap = pltpu.get_tpu_info().vmem_capacity_bytes
    except Exception:
        cap = 64 << 20                    # conservative (v7x per-TC VMEM)
    return min(max(est, 32 << 20), int(cap * 0.9))


def multi_head_self_attention(x, packed, *, q_tile=None):
    """x: (B, N, C) float32.  packed: output of pack_mhsa_params (built once)."""
    B, N, C = x.shape
    D = packed["head_dim"]
    Hb = packed["heads_per_block"]
    H = packed["num_heads"]
    G = H // Hb
    Tq = _pick_q_tile(N) if q_tile is None else q_tile
    assert N % Tq == 0

    x_bf = x.astype(jnp.bfloat16)
    kernel = functools.partial(_mhsa_kernel, head_dim=D, heads_per_block=Hb)

    return pl.pallas_call(
        kernel,
        # NOTE: output kept f32 for parity with the PyTorch module; emit bf16 here if the
        # consumer tolerates it (halves writeback + resident output block).
        out_shape=jax.ShapeDtypeStruct((B, N, C), jnp.float32),
        grid_spec=pltpu.PrefetchScalarGridSpec(
            num_scalar_prefetch=0,
            grid=(B, N // Tq, G),                         # head-block axis = reduction (last)
            in_specs=[
                pl.BlockSpec((1, Tq, C), lambda b, qi, h: (b, qi, 0)),        # x (query rows)
                pl.BlockSpec((1, N, C), lambda b, qi, h: (b, 0, 0)),          # x (full, K/V)
                pl.BlockSpec((1, C, Hb * D), lambda b, qi, h: (h, 0, 0)),     # Wq block (scaled)
                pl.BlockSpec((1, 1, Hb * D), lambda b, qi, h: (h, 0, 0)),     # bq block (scaled)
                pl.BlockSpec((1, C, 2 * Hb * D), lambda b, qi, h: (h, 0, 0)),  # W[k|v] block
                pl.BlockSpec((1, 1, 2 * Hb * D), lambda b, qi, h: (h, 0, 0)),  # b[k|v] block
                pl.BlockSpec((1, Hb * D, C), lambda b, qi, h: (h, 0, 0)),     # Wo block
                pl.BlockSpec((1, C), lambda b, qi, h: (0, 0)),                # bo
            ],
            out_specs=pl.BlockSpec((1, Tq, C), lambda b, qi, h: (b, qi, 0)),
        ),
        compiler_params=pltpu.CompilerParams(
            dimension_semantics=("parallel", "parallel", "arbitrary"),
            vmem_limit_bytes=_vmem_limit_bytes(N, Tq, C, D, Hb)),
    )(x_bf, x_bf, packed["wq"], packed["bq"], packed["wkv"], packed["bkv"],
      packed["wo"], packed["bo"])


# --------------------------------------------------------------------------------------
# Synthetic init + plain-JAX reference + test
# --------------------------------------------------------------------------------------
def _init_params(key, embed_dim):
    """Deterministic synthetic init.  Weights stored already transposed: (in, out)."""
    ks = jax.random.split(key, 8)
    bound = 1.0 / math.sqrt(embed_dim)

    def w(k):
        return jax.random.uniform(k, (embed_dim, embed_dim), jnp.float32, -bound, bound)

    def b(k):
        return jax.random.uniform(k, (1, embed_dim), jnp.float32, -bound, bound)

    return {
        "wq": w(ks[0]), "bq": b(ks[1]),
        "wk": w(ks[2]), "bk": b(ks[3]),
        "wv": w(ks[4]), "bv": b(ks[5]),
        "wo": w(ks[6]), "bo": b(ks[7]),
    }


def _reference(x, params, num_heads):
    """Plain-JAX replica of the PyTorch forward pass, mirroring the kernel's
    mixed precision (bf16 matmul operands, f32 accumulation/softmax)."""
    f32, bf = jnp.float32, jnp.bfloat16

    def r(a):  # round-trip through bf16 (matches MXU bf16 operand rounding)
        return a.astype(bf).astype(f32)

    B, N, C = x.shape
    H = num_heads
    D = C // H

    xb = r(x)
    q = xb @ r(params["wq"]) + params["bq"][0]
    k = xb @ r(params["wk"]) + params["bk"][0]
    v = xb @ r(params["wv"]) + params["bv"][0]

    q = q.reshape(B, N, H, D).transpose(0, 2, 1, 3)
    k = k.reshape(B, N, H, D).transpose(0, 2, 1, 3)
    v = v.reshape(B, N, H, D).transpose(0, 2, 1, 3)

    s = jnp.einsum("bhnd,bhmd->bhnm", r(q), r(k)) / math.sqrt(D)
    p = jax.nn.softmax(s, axis=-1)
    o = jnp.einsum("bhnm,bhmd->bhnd", r(p), r(v)).transpose(0, 2, 1, 3).reshape(B, N, C)
    return r(o) @ r(params["wo"]) + params["bo"][0]


if __name__ == "__main__":
    B, N, C = 2, 8, 32
    num_heads = 4

    key = jax.random.PRNGKey(0)
    k_x, k_p = jax.random.split(key)
    x = jax.random.normal(k_x, (B, N, C), jnp.float32)
    params = _init_params(k_p, C)

    # Pack / re-layout weights ONCE (hoisted out of the per-call path).
    packed = pack_mhsa_params(params, num_heads)

    out = multi_head_self_attention(x, packed)
    out = jax.block_until_ready(out)

    ref = _reference(x, params, num_heads)
    assert out.shape == (B, N, C)
    max_err = float(jnp.max(jnp.abs(out - ref)))
    assert jnp.allclose(out, ref, atol=1e-2, rtol=1e-2), (
        f"Pallas output mismatch vs reference (max abs err {max_err})")

    print("KERNEL_OK")
</pallas_src>

<mosaic_0001>
module attributes {stable_mosaic.version = 11 : i64} {
  func.func @_mhsa_kernel(%arg0: i32, %arg1: i32, %arg2: i32, %arg3: memref<1x8x32xbf16, #tpu.memory_space<vmem>>, %arg4: memref<1x8x32xbf16, #tpu.memory_space<vmem>>, %arg5: memref<1x32x16xbf16, #tpu.memory_space<vmem>>, %arg6: memref<1x1x16xf32, #tpu.memory_space<vmem>>, %arg7: memref<1x32x32xbf16, #tpu.memory_space<vmem>>, %arg8: memref<1x1x32xf32, #tpu.memory_space<vmem>>, %arg9: memref<1x16x32xbf16, #tpu.memory_space<vmem>>, %arg10: memref<1x32xf32, #tpu.memory_space<vmem>>, %arg11: memref<1x8x32xf32, #tpu.memory_space<vmem>>) attributes {dimension_semantics = [#tpu.dimension_semantics<parallel>, #tpu.dimension_semantics<parallel>, #tpu.dimension_semantics<arbitrary>], iteration_bounds = array<i64: 2, 1, 2>, scalar_prefetch = 0 : i64, scratch_operands = 0 : i64, tpu.core_type = #tpu.core_type<tc>, window_params = [{transform_indices = @transform_0, window_bounds = array<i64: 1, 8, 32>}, {transform_indices = @transform_1, window_bounds = array<i64: 1, 8, 32>}, {transform_indices = @transform_2, window_bounds = array<i64: 1, 32, 16>}, {transform_indices = @transform_3, window_bounds = array<i64: 1, 1, 16>}, {transform_indices = @transform_4, window_bounds = array<i64: 1, 32, 32>}, {transform_indices = @transform_5, window_bounds = array<i64: 1, 1, 32>}, {transform_indices = @transform_6, window_bounds = array<i64: 1, 16, 32>}, {pipeline_mode = #tpu.pipeline_mode<synchronous>, transform_indices = @transform_7, window_bounds = array<i64: 1, 32>}, {transform_indices = @transform_8, window_bounds = array<i64: 1, 8, 32>}]} {
    %c0 = arith.constant 0 : index
    %c0_0 = arith.constant 0 : index
    %c0_1 = arith.constant 0 : index
    %0 = vector.load %arg3[%c0, %c0_0, %c0_1] : memref<1x8x32xbf16, #tpu.memory_space<vmem>>, vector<1x8x32xbf16>
    %1 = vector.shape_cast %0 : vector<1x8x32xbf16> to vector<8x32xbf16>
    %c0_2 = arith.constant 0 : index
    %c0_3 = arith.constant 0 : index
    %c0_4 = arith.constant 0 : index
    %2 = vector.load %arg4[%c0_2, %c0_3, %c0_4] : memref<1x8x32xbf16, #tpu.memory_space<vmem>>, vector<1x8x32xbf16>
    %3 = vector.shape_cast %2 : vector<1x8x32xbf16> to vector<8x32xbf16>
    %c0_i32 = arith.constant 0 : i32
    %4 = arith.cmpi eq, %arg2, %c0_i32 : i32
    %5 = arith.extui %4 : i1 to i32
    %c0_i32_5 = arith.constant 0 : i32
    %6 = arith.cmpi ne, %5, %c0_i32_5 : i32
    scf.if %6 {
      %c0_39 = arith.constant 0 : index
      %c0_40 = arith.constant 0 : index
      %75 = vector.load %arg10[%c0_39, %c0_40] : memref<1x32xf32, #tpu.memory_space<vmem>>, vector<1x32xf32>
      %76 = vector.shape_cast %75 : vector<1x32xf32> to vector<1x32xf32>
      %77 = vector.broadcast %76 : vector<1x32xf32> to vector<8x32xf32>
      %c0_41 = arith.constant 0 : index
      %c0_42 = arith.constant 0 : index
      %c0_43 = arith.constant 0 : index
      %78 = vector.load %arg11[%c0_41, %c0_42, %c0_43] : memref<1x8x32xf32, #tpu.memory_space<vmem>>, vector<1x8x32xf32>
      %79 = vector.shape_cast %78 : vector<1x8x32xf32> to vector<8x32xf32>
      %80 = vector.shape_cast %77 : vector<8x32xf32> to vector<1x8x32xf32>
      tpu.vector_store %arg11[%c0_41, %c0_42, %c0_43], %80 {strides = array<i32>} : memref<1x8x32xf32, #tpu.memory_space<vmem>>, vector<1x8x32xf32>,
    } else {
    }
    %c0_6 = arith.constant 0 : index
    %c0_7 = arith.constant 0 : index
    %c0_8 = arith.constant 0 : index
    %7 = vector.load %arg5[%c0_6, %c0_7, %c0_8] : memref<1x32x16xbf16, #tpu.memory_space<vmem>>, vector<1x32x16xbf16>
    %8 = vector.shape_cast %7 : vector<1x32x16xbf16> to vector<32x16xbf16>
    %cst = arith.constant dense<0.000000e+00> : vector<8x16xf32>
    %9 = tpu.matmul %1, %8, %cst {dimension_numbers = #tpu.dot_dimension_numbers<[1], [0], [0], [1], [0, 0, 1, 1], [], []>} : vector<8x32xbf16>, vector<32x16xbf16>, vector<8x16xf32> -> vector<8x16xf32>
    %c0_9 = arith.constant 0 : index
    %c0_10 = arith.constant 0 : index
    %c0_11 = arith.constant 0 : index
    %10 = vector.load %arg6[%c0_9, %c0_10, %c0_11] : memref<1x1x16xf32, #tpu.memory_space<vmem>>, vector<1x1x16xf32>
    %11 = vector.shape_cast %10 : vector<1x1x16xf32> to vector<1x16xf32>
    %12 = vector.broadcast %11 : vector<1x16xf32> to vector<8x16xf32>
    %13 = arith.addf %9, %12 : vector<8x16xf32>
    %c0_12 = arith.constant 0 : index
    %c0_13 = arith.constant 0 : index
    %c0_14 = arith.constant 0 : index
    %14 = vector.load %arg7[%c0_12, %c0_13, %c0_14] : memref<1x32x32xbf16, #tpu.memory_space<vmem>>, vector<1x32x32xbf16>
    %15 = vector.shape_cast %14 : vector<1x32x32xbf16> to vector<32x32xbf16>
    %cst_15 = arith.constant dense<0.000000e+00> : vector<8x32xf32>
    %16 = tpu.matmul %3, %15, %cst_15 {dimension_numbers = #tpu.dot_dimension_numbers<[1], [0], [0], [1], [0, 0, 1, 1], [], []>} : vector<8x32xbf16>, vector<32x32xbf16>, vector<8x32xf32> -> vector<8x32xf32>
    %c0_16 = arith.constant 0 : index
    %c0_17 = arith.constant 0 : index
    %c0_18 = arith.constant 0 : index
    %17 = vector.load %arg8[%c0_16, %c0_17, %c0_18] : memref<1x1x32xf32, #tpu.memory_space<vmem>>, vector<1x1x32xf32>
    %18 = vector.shape_cast %17 : vector<1x1x32xf32> to vector<1x32xf32>
    %19 = vector.broadcast %18 : vector<1x32xf32> to vector<8x32xf32>
    %20 = arith.addf %16, %19 : vector<8x32xf32>
    %21 = arith.truncf %13 : vector<8x16xf32> to vector<8x16xbf16>
    %22 = vector.extract_strided_slice %20 {offsets = [0, 0], sizes = [8, 16], strides = [1, 1]} : vector<8x32xf32> to vector<8x16xf32>
    %23 = arith.truncf %22 : vector<8x16xf32> to vector<8x16xbf16>
    %24 = vector.extract_strided_slice %20 {offsets = [0, 16], sizes = [8, 16], strides = [1, 1]} : vector<8x32xf32> to vector<8x16xf32>
    %25 = arith.truncf %24 : vector<8x16xf32> to vector<8x16xbf16>
    %c0_19 = arith.constant 0 : index
    %c0_20 = arith.constant 0 : index
    %c0_21 = arith.constant 0 : index
    %26 = vector.load %arg9[%c0_19, %c0_20, %c0_21] : memref<1x16x32xbf16, #tpu.memory_space<vmem>>, vector<1x16x32xbf16>
    %27 = vector.shape_cast %26 : vector<1x16x32xbf16> to vector<16x32xbf16>
    %cst_22 = arith.constant 0.000000e+00 : f32
    %28 = vector.broadcast %cst_22 : f32 to vector<8x32xf32>
    %29 = vector.extract_strided_slice %21 {offsets = [0, 0], sizes = [8, 8], strides = [1, 1]} : vector<8x16xbf16> to vector<8x8xbf16>
    %30 = vector.extract_strided_slice %23 {offsets = [0, 0], sizes = [8, 8], strides = [1, 1]} : vector<8x16xbf16> to vector<8x8xbf16>
    %31 = vector.extract_strided_slice %25 {offsets = [0, 0], sizes = [8, 8], strides = [1, 1]} : vector<8x16xbf16> to vector<8x8xbf16>
    %cst_23 = arith.constant dense<0.000000e+00> : vector<8x8xf32>
    %32 = tpu.matmul %29, %30, %cst_23 {dimension_numbers = #tpu.dot_dimension_numbers<[1], [1], [0], [0], [0, 0, 1, 0], [], []>} : vector<8x8xbf16>, vector<8x8xbf16>, vector<8x8xf32> -> vector<8x8xf32>
    %cst_24 = arith.constant dense<0xFF800000> : vector<8xf32>
    %33 = vector.multi_reduction <maximumf>, %32, %cst_24 [1] : vector<8x8xf32> to vector<8xf32>
    %34 = vector.shape_cast %33 : vector<8xf32> to vector<8x1xf32>
    %35 = vector.broadcast %34 : vector<8x1xf32> to vector<8x8xf32>
    %36 = arith.subf %32, %35 : vector<8x8xf32>
    %37 = math.exp %36 : vector<8x8xf32>
    %cst_25 = arith.constant dense<0.000000e+00> : vector<8xf32>
    %38 = vector.multi_reduction <add>, %37, %cst_25 [1] : vector<8x8xf32> to vector<8xf32>
    %39 = vector.shape_cast %38 : vector<8xf32> to vector<8x1xf32>
    %40 = arith.truncf %37 : vector<8x8xf32> to vector<8x8xbf16>
    %cst_26 = arith.constant dense<0.000000e+00> : vector<8x8xf32>
    %41 = tpu.matmul %40, %31, %cst_26 {dimension_numbers = #tpu.dot_dimension_numbers<[1], [0], [0], [1], [0, 0, 1, 1], [], []>} : vector<8x8xbf16>, vector<8x8xbf16>, vector<8x8xf32> -> vector<8x8xf32>
    %42 = tpu.reciprocal %39 {approx = true} : vector<8x1xf32> -> vector<8x1xf32>
    %43 = vector.broadcast %42 : vector<8x1xf32> to vector<8x8xf32>
    %44 = arith.mulf %41, %43 : vector<8x8xf32>
    %45 = arith.truncf %44 : vector<8x8xf32> to vector<8x8xbf16>
    %46 = vector.extract_strided_slice %27 {offsets = [0, 0], sizes = [8, 32], strides = [1, 1]} : vector<16x32xbf16> to vector<8x32xbf16>
    %cst_27 = arith.constant dense<0.000000e+00> : vector<8x32xf32>
    %47 = tpu.matmul %45, %46, %cst_27 {dimension_numbers = #tpu.dot_dimension_numbers<[1], [0], [0], [1], [0, 0, 1, 1], [], []>} : vector<8x8xbf16>, vector<8x32xbf16>, vector<8x32xf32> -> vector<8x32xf32>
    %48 = arith.addf %28, %47 : vector<8x32xf32>
    %49 = vector.extract_strided_slice %21 {offsets = [0, 8], sizes = [8, 8], strides = [1, 1]} : vector<8x16xbf16> to vector<8x8xbf16>
    %50 = vector.extract_strided_slice %23 {offsets = [0, 8], sizes = [8, 8], strides = [1, 1]} : vector<8x16xbf16> to vector<8x8xbf16>
    %51 = vector.extract_strided_slice %25 {offsets = [0, 8], sizes = [8, 8], strides = [1, 1]} : vector<8x16xbf16> to vector<8x8xbf16>
    %cst_28 = arith.constant dense<0.000000e+00> : vector<8x8xf32>
    %52 = tpu.matmul %49, %50, %cst_28 {dimension_numbers = #tpu.dot_dimension_numbers<[1], [1], [0], [0], [0, 0, 1, 0], [], []>} : vector<8x8xbf16>, vector<8x8xbf16>, vector<8x8xf32> -> vector<8x8xf32>
    %cst_29 = arith.constant dense<0xFF800000> : vector<8xf32>
    %53 = vector.multi_reduction <maximumf>, %52, %cst_29 [1] : vector<8x8xf32> to vector<8xf32>
    %54 = vector.shape_cast %53 : vector<8xf32> to vector<8x1xf32>
    %55 = vector.broadcast %54 : vector<8x1xf32> to vector<8x8xf32>
    %56 = arith.subf %52, %55 : vector<8x8xf32>
    %57 = math.exp %56 : vector<8x8xf32>
    %cst_30 = arith.constant dense<0.000000e+00> : vector<8xf32>
    %58 = vector.multi_reduction <add>, %57, %cst_30 [1] : vector<8x8xf32> to vector<8xf32>
    %59 = vector.shape_cast %58 : vector<8xf32> to vector<8x1xf32>
    %60 = arith.truncf %57 : vector<8x8xf32> to vector<8x8xbf16>
    %cst_31 = arith.constant dense<0.000000e+00> : vector<8x8xf32>
    %61 = tpu.matmul %60, %51, %cst_31 {dimension_numbers = #tpu.dot_dimension_numbers<[1], [0], [0], [1], [0, 0, 1, 1], [], []>} : vector<8x8xbf16>, vector<8x8xbf16>, vector<8x8xf32> -> vector<8x8xf32>
    %62 = tpu.reciprocal %59 {approx = true} : vector<8x1xf32> -> vector<8x1xf32>
    %63 = vector.broadcast %62 : vector<8x1xf32> to vector<8x8xf32>
    %64 = arith.mulf %61, %63 : vector<8x8xf32>
    %65 = arith.truncf %64 : vector<8x8xf32> to vector<8x8xbf16>
    %66 = vector.extract_strided_slice %27 {offsets = [8, 0], sizes = [8, 32], strides = [1, 1]} : vector<16x32xbf16> to vector<8x32xbf16>
    %cst_32 = arith.constant dense<0.000000e+00> : vector<8x32xf32>
    %67 = tpu.matmul %65, %66, %cst_32 {dimension_numbers = #tpu.dot_dimension_numbers<[1], [0], [0], [1], [0, 0, 1, 1], [], []>} : vector<8x8xbf16>, vector<8x32xbf16>, vector<8x32xf32> -> vector<8x32xf32>
    %68 = arith.addf %48, %67 : vector<8x32xf32>
    %c0_33 = arith.constant 0 : index
    %c0_34 = arith.constant 0 : index
    %c0_35 = arith.constant 0 : index
    %69 = vector.load %arg11[%c0_33, %c0_34, %c0_35] : memref<1x8x32xf32, #tpu.memory_space<vmem>>, vector<1x8x32xf32>
    %70 = vector.shape_cast %69 : vector<1x8x32xf32> to vector<8x32xf32>
    %71 = arith.addf %70, %68 : vector<8x32xf32>
    %c0_36 = arith.constant 0 : index
    %c0_37 = arith.constant 0 : index
    %c0_38 = arith.constant 0 : index
    %72 = vector.load %arg11[%c0_36, %c0_37, %c0_38] : memref<1x8x32xf32, #tpu.memory_space<vmem>>, vector<1x8x32xf32>
    %73 = vector.shape_cast %72 : vector<1x8x32xf32> to vector<8x32xf32>
    %74 = vector.shape_cast %71 : vector<8x32xf32> to vector<1x8x32xf32>
    tpu.vector_store %arg11[%c0_36, %c0_37, %c0_38], %74 {strides = array<i32>} : memref<1x8x32xf32, #tpu.memory_space<vmem>>, vector<1x8x32xf32>,
    return
  }
  func.func @transform_0(%arg0: i32, %arg1: i32, %arg2: i32) -> (i32, i32, i32) {
    %c0_i32 = arith.constant 0 : i32
    %c0_i32_0 = arith.constant 0 : i32
    return %arg0, %arg1, %c0_i32 : i32, i32, i32
  }
  func.func @transform_1(%arg0: i32, %arg1: i32, %arg2: i32) -> (i32, i32, i32) {
    %c0_i32 = arith.constant 0 : i32
    %c0_i32_0 = arith.constant 0 : i32
    %c0_i32_1 = arith.constant 0 : i32
    return %arg0, %c0_i32, %c0_i32_0 : i32, i32, i32
  }
  func.func @transform_2(%arg0: i32, %arg1: i32, %arg2: i32) -> (i32, i32, i32) {
    %c0_i32 = arith.constant 0 : i32
    %c0_i32_0 = arith.constant 0 : i32
    %c0_i32_1 = arith.constant 0 : i32
    return %arg2, %c0_i32, %c0_i32_0 : i32, i32, i32
  }
  func.func @transform_3(%arg0: i32, %arg1: i32, %arg2: i32) -> (i32, i32, i32) {
    %c0_i32 = arith.constant 0 : i32
    %c0_i32_0 = arith.constant 0 : i32
    %c0_i32_1 = arith.constant 0 : i32
    return %arg2, %c0_i32, %c0_i32_0 : i32, i32, i32
  }
  func.func @transform_4(%arg0: i32, %arg1: i32, %arg2: i32) -> (i32, i32, i32) {
    %c0_i32 = arith.constant 0 : i32
    %c0_i32_0 = arith.constant 0 : i32
    %c0_i32_1 = arith.constant 0 : i32
    return %arg2, %c0_i32, %c0_i32_0 : i32, i32, i32
  }
  func.func @transform_5(%arg0: i32, %arg1: i32, %arg2: i32) -> (i32, i32, i32) {
    %c0_i32 = arith.constant 0 : i32
    %c0_i32_0 = arith.constant 0 : i32
    %c0_i32_1 = arith.constant 0 : i32
    return %arg2, %c0_i32, %c0_i32_0 : i32, i32, i32
  }
  func.func @transform_6(%arg0: i32, %arg1: i32, %arg2: i32) -> (i32, i32, i32) {
    %c0_i32 = arith.constant 0 : i32
    %c0_i32_0 = arith.constant 0 : i32
    %c0_i32_1 = arith.constant 0 : i32
    return %arg2, %c0_i32, %c0_i32_0 : i32, i32, i32
  }
  func.func @transform_7(%arg0: i32, %arg1: i32, %arg2: i32) -> (i32, i32) {
    %c0_i32 = arith.constant 0 : i32
    %c0_i32_0 = arith.constant 0 : i32
    %c0_i32_1 = arith.constant 0 : i32
    return %c0_i32, %c0_i32_0 : i32, i32
  }
  func.func @transform_8(%arg0: i32, %arg1: i32, %arg2: i32) -> (i32, i32, i32) {
    %c0_i32 = arith.constant 0 : i32
    %c0_i32_0 = arith.constant 0 : i32
    return %arg0, %arg1, %c0_i32 : i32, i32, i32
  }
}

</mosaic_0001>

<llo_original>
// kernel: tpu_custom_call.1
$region0: #{tpu_custom_call.1}
  #allocation0 [shape = 'u32[]', space=smem, size = 0x4, offset = 0x4, fixed_abs, tag = 'smem constant byte address 0x4 - core index']
  #allocation1 [shape = 'u32[72,128]{1,0:T(1,128)}', space=vmem, size = 0x9000, scoped, tag = 'internal scratch']
  %s0 = inlined_call_operand.hbm [shape: bf16[2,8,32], index: 0, kind: input, shape index: {}]
  %s1 = inlined_call_operand.hbm [shape: bf16[2,8,32], index: 1, kind: input, shape index: {}]
  %s2 = inlined_call_operand.vmem [shape: bf16[2,32,16], index: 2, kind: input, shape index: {}]
  %s3 = inlined_call_operand.vmem [shape: f32[2,1,16], index: 3, kind: input, shape index: {}]
  %s4 = inlined_call_operand.vmem [shape: bf16[2,32,32], index: 4, kind: input, shape index: {}]
  %s5 = inlined_call_operand.vmem [shape: f32[2,1,32], index: 5, kind: input, shape index: {}]
  %s6 = inlined_call_operand.vmem [shape: bf16[2,16,32], index: 6, kind: input, shape index: {}]
  %s7 = inlined_call_operand.vmem [shape: f32[1,32], index: 7, kind: input, shape index: {}]
  %s8 = inlined_call_operand.hbm [shape: f32[2,8,32], index: 8, kind: output, shape index: {}]
  %s9 = sld [smem:[#allocation0]]
  $region77: #{tpu_custom_call.1} parent=0
    _
  %s11 = ssub.s32 1, %s9
  %s12 = scalar_select 0, %s11, %s9
  $region1: #{tpu_custom_call.1} parent=0
    #allocation2 [shape = 'u8[4096]{0}', space=vmem, size = 0x1000, scoped, tag = 'input window, operand 0']
    #allocation3 [shape = 's32[2]{0}', space=sflag, size = 0x8, scoped, tag = 'scoped memory for tpu_custom_call.1']
    #allocation4 [shape = 's32[2]{0}', space=sflag, size = 0x8, scoped, tag = 'scoped memory for tpu_custom_call.1']
    #allocation5 [shape = 'u8[4096]{0}', space=vmem, size = 0x1000, scoped, tag = 'input window, operand 1']
    #allocation6 [shape = 's32[2]{0}', space=sflag, size = 0x8, scoped, tag = 'scoped memory for tpu_custom_call.1']
    #allocation7 [shape = 'u8[8192]{0}', space=vmem, size = 0x2000, scoped, tag = 'output window, operand 0']
    %13 = vsyncpa [#allocation3], 0
    %s14 = scalar_lea.sflag [#allocation3], 1
    %15 = vsyncpa %s14, 0
    %16 = vsyncpa [#allocation6], 0
    %s17 = scalar_lea.sflag [#allocation6], 1
    %18 = vsyncpa %s17, 0
    %19 = vsyncpa [#allocation4], 0
    %s20 = scalar_lea.sflag [#allocation4], 1
    %21 = vsyncpa %s20, 0
    loop: start=0, step=1, limit=6
    $region2: #{tpu_custom_call.1} parent=1 // loop_pre_header
      _
    $region3: #{tpu_custom_call.1} parent=1 // loop_header
      %s23 = sphi 0, %s27
      %p24 = scmp.ge.s32.totalorder %s23, 6
      %s30 = sphi 0, %s49
      %s31 = sphi 0, %s45
      %s32 = sphi 0, %s41
      %s33 = sphi 0, %s30
      %s34 = sphi 0, %s31
      %s35 = sphi 0, %s32
      %s36 = sphi 0, %s33
      %s37 = sphi 0, %s34
      %s38 = sphi 0, %s35
      %s54 = sphi 0, %s56
      %s57 = sphi 0, %s54
      %s58 = sphi 0, %s57
      %s74 = sphi 0, %s58
      %s80 = sphi 0, %s82
      %s83 = sphi 0, %s80
      %s84 = sphi 0, %s83
      %s100 = sphi 0, %s84
      %s106 = sphi 0, %s108
      %s109 = sphi 0, %s106
      %s110 = sphi 0, %s109
      %s126 = sphi 0, %s110
      %s132 = sphi 0, %s134
      %s135 = sphi 0, %s132
      %s136 = sphi 0, %s135
      %s152 = sphi 0, %s136
      %s158 = sphi 0, %s160
      %s161 = sphi 0, %s158
      %s162 = sphi 0, %s161
      %s178 = sphi 0, %s162
      %s184 = sphi 0, %s186
      %s187 = sphi 0, %s184
      %s188 = sphi 0, %s187
      %s204 = sphi 0, %s188
      %s210 = sphi 0, %s212
      %s213 = sphi 0, %s210
      %s214 = sphi 0, %s213
      %s230 = sphi 0, %s214
      %s234 = sphi 0, %s234
      %s236 = sphi 0, %s234
      %s237 = sphi 0, %s236
      %s251 = sphi 0, %s237
      %s259 = sphi 0, %s261
      %s262 = sphi 0, %s259
      %s263 = sphi 0, %s262
      %s279 = sphi 0, %s263
    $region4: #{tpu_custom_call.1} parent=1 // loop_header_branch
      %26 = sbr.rel (%p24) target = $region8
    $region5: #{tpu_custom_call.1} parent=1 // loop_body
      %s28 = ssub.s32 %s23, 1
      %s29 = ssub.s32 %s23, 2
      %s39 = sadd.s32 1, %s32
      %p40 = scmp.ge.s32.totalorder %s39, 2
      %s41 = scalar_select %p40, 0, %s39
      %s42 = sadd.s32 1, %s31
      %s43 = scalar_select %p40, %s42, %s31
      %p44 = scmp.ge.s32.totalorder %s43, 1
      %s45 = scalar_select %p44, 0, %s43
      %s46 = sadd.s32 1, %s30
      %s47 = scalar_select %p44, %s46, %s30
      %p48 = scmp.ge.s32.totalorder %s47, 2
      %s49 = scalar_select %p48, 0, %s47
      %s50 = ssub.s32 %s30, %s49
      %s51 = ssub.s32 %s31, %s45
      %s52 = sor.u32 %s50, %s51
      %p53 = scmp.eq.s32.totalorder %s52, 0
      %s55 = sadd.s32 %s54, 1
      %s56 = scalar_select %p53, %s54, %s55
      %p59 = pneg %p53
      %p60 = scmp.eq.s32.totalorder %s23, 3
      %p61 = por %p59, %p60
      %p62 = scmp.ne.s32.totalorder %s54, %s57
      %p63 = scmp.eq.s32.totalorder %s23, 0
      %p64 = por %p62, %p63
      %p65 = scmp.ne.s32.totalorder %s54, %s57
      %p66 = scmp.eq.s32.totalorder %s28, 3
      %p67 = por %p65, %p66
      %p68 = scmp.ne.s32.totalorder %s57, %s58
      %p69 = scmp.eq.s32.totalorder %s28, 0
      %p70 = por %p68, %p69
      %p71 = scmp.ne.s32.totalorder %s57, %s58
      %p72 = scmp.eq.s32.totalorder %s29, 3
      %p73 = por %p71, %p72
      %p75 = scmp.ne.s32.totalorder %s58, %s74
      %p76 = scmp.eq.s32.totalorder %s29, 0
      %p77 = por %p75, %p76
      %s78 = ssub.s32 %s30, %s49
      %p79 = scmp.eq.s32.totalorder %s78, 0
      %s81 = sadd.s32 %s80, 1
      %s82 = scalar_select %p79, %s80, %s81
      %p85 = pneg %p79
      %p86 = scmp.eq.s32.totalorder %s23, 3
      %p87 = por %p85, %p86
      %p88 = scmp.ne.s32.totalorder %s80, %s83
      %p89 = scmp.eq.s32.totalorder %s23, 0
      %p90 = por %p88, %p89
      %p91 = scmp.ne.s32.totalorder %s80, %s83
      %p92 = scmp.eq.s32.totalorder %s28, 3
      %p93 = por %p91, %p92
      %p94 = scmp.ne.s32.totalorder %s83, %s84
      %p95 = scmp.eq.s32.totalorder %s28, 0
      %p96 = por %p94, %p95
      %p97 = scmp.ne.s32.totalorder %s83, %s84
      %p98 = scmp.eq.s32.totalorder %s29, 3
      %p99 = por %p97, %p98
      %p101 = scmp.ne.s32.totalorder %s84, %s100
      %p102 = scmp.eq.s32.totalorder %s29, 0
      %p103 = por %p101, %p102
      %s104 = ssub.s32 %s32, %s41
      %p105 = scmp.eq.s32.totalorder %s104, 0
      %s107 = sadd.s32 %s106, 1
      %s108 = scalar_select %p105, %s106, %s107
      %p111 = pneg %p105
      %p112 = scmp.eq.s32.totalorder %s23, 3
      %p113 = por %p111, %p112
      %p114 = scmp.ne.s32.totalorder %s106, %s109
      %p115 = scmp.eq.s32.totalorder %s23, 0
      %p116 = por %p114, %p115
      %p117 = scmp.ne.s32.totalorder %s106, %s109
      %p118 = scmp.eq.s32.totalorder %s28, 3
      %p119 = por %p117, %p118
      %p120 = scmp.ne.s32.totalorder %s109, %s110
      %p121 = scmp.eq.s32.totalorder %s28, 0
      %p122 = por %p120, %p121
      %p123 = scmp.ne.s32.totalorder %s109, %s110
      %p124 = scmp.eq.s32.totalorder %s29, 3
      %p125 = por %p123, %p124
      %p127 = scmp.ne.s32.totalorder %s110, %s126
      %p128 = scmp.eq.s32.totalorder %s29, 0
      %p129 = por %p127, %p128
      %s130 = ssub.s32 %s32, %s41
      %p131 = scmp.eq.s32.totalorder %s130, 0
      %s133 = sadd.s32 %s132, 1
      %s134 = scalar_select %p131, %s132, %s133
      %p137 = pneg %p131
      %p138 = scmp.eq.s32.totalorder %s23, 3
      %p139 = por %p137, %p138
      %p140 = scmp.ne.s32.totalorder %s132, %s135
      %p141 = scmp.eq.s32.totalorder %s23, 0
      %p142 = por %p140, %p141
      %p143 = scmp.ne.s32.totalorder %s132, %s135
      %p144 = scmp.eq.s32.totalorder %s28, 3
      %p145 = por %p143, %p144
      %p146 = scmp.ne.s32.totalorder %s135, %s136
      %p147 = scmp.eq.s32.totalorder %s28, 0
      %p148 = por %p146, %p147
      %p149 = scmp.ne.s32.totalorder %s135, %s136
      %p150 = scmp.eq.s32.totalorder %s29, 3
      %p151 = por %p149, %p150
      %p153 = scmp.ne.s32.totalorder %s136, %s152
      %p154 = scmp.eq.s32.totalorder %s29, 0
      %p155 = por %p153, %p154
      %s156 = ssub.s32 %s32, %s41
      %p157 = scmp.eq.s32.totalorder %s156, 0
      %s159 = sadd.s32 %s158, 1
      %s160 = scalar_select %p157, %s158, %s159
      %p163 = pneg %p157
      %p164 = scmp.eq.s32.totalorder %s23, 3
      %p165 = por %p163, %p164
      %p166 = scmp.ne.s32.totalorder %s158, %s161
      %p167 = scmp.eq.s32.totalorder %s23, 0
      %p168 = por %p166, %p167
      %p169 = scmp.ne.s32.totalorder %s158, %s161
      %p170 = scmp.eq.s32.totalorder %s28, 3
      %p171 = por %p169, %p170
      %p172 = scmp.ne.s32.totalorder %s161, %s162
      %p173 = scmp.eq.s32.totalorder %s28, 0
      %p174 = por %p172, %p173
      %p175 = scmp.ne.s32.totalorder %s161, %s162
      %p176 = scmp.eq.s32.totalorder %s29, 3
      %p177 = por %p175, %p176
      %p179 = scmp.ne.s32.totalorder %s162, %s178
      %p180 = scmp.eq.s32.totalorder %s29, 0
      %p181 = por %p179, %p180
      %s182 = ssub.s32 %s32, %s41
      %p183 = scmp.eq.s32.totalorder %s182, 0
      %s185 = sadd.s32 %s184, 1
      %s186 = scalar_select %p183, %s184, %s185
      %p189 = pneg %p183
      %p190 = scmp.eq.s32.totalorder %s23, 3
      %p191 = por %p189, %p190
      %p192 = scmp.ne.s32.totalorder %s184, %s187
      %p193 = scmp.eq.s32.totalorder %s23, 0
      %p194 = por %p192, %p193
      %p195 = scmp.ne.s32.totalorder %s184, %s187
      %p196 = scmp.eq.s32.totalorder %s28, 3
      %p197 = por %p195, %p196
      %p198 = scmp.ne.s32.totalorder %s187, %s188
      %p199 = scmp.eq.s32.totalorder %s28, 0
      %p200 = por %p198, %p199
      %p201 = scmp.ne.s32.totalorder %s187, %s188
      %p202 = scmp.eq.s32.totalorder %s29, 3
      %p203 = por %p201, %p202
      %p205 = scmp.ne.s32.totalorder %s188, %s204
      %p206 = scmp.eq.s32.totalorder %s29, 0
      %p207 = por %p205, %p206
      %s208 = ssub.s32 %s32, %s41
      %p209 = scmp.eq.s32.totalorder %s208, 0
      %s211 = sadd.s32 %s210, 1
      %s212 = scalar_select %p209, %s210, %s211
      %p215 = pneg %p209
      %p216 = scmp.eq.s32.totalorder %s23, 3
      %p217 = por %p215, %p216
      %p218 = scmp.ne.s32.totalorder %s210, %s213
      %p219 = scmp.eq.s32.totalorder %s23, 0
      %p220 = por %p218, %p219
      %p221 = scmp.ne.s32.totalorder %s210, %s213
      %p222 = scmp.eq.s32.totalorder %s28, 3
      %p223 = por %p221, %p222
      %p224 = scmp.ne.s32.totalorder %s213, %s214
      %p225 = scmp.eq.s32.totalorder %s28, 0
      %p226 = por %p224, %p225
      %p227 = scmp.ne.s32.totalorder %s213, %s214
      %p228 = scmp.eq.s32.totalorder %s29, 3
      %p229 = por %p227, %p228
      %p231 = scmp.ne.s32.totalorder %s214, %s230
      %p232 = scmp.eq.s32.totalorder %s29, 0
      %p233 = por %p231, %p232
      %s235 = sadd.s32 %s234, 1
      %p238 = scmp.eq.s32.totalorder %s23, 3
      %p239 = scmp.ne.s32.totalorder %s234, %s236
      %p240 = scmp.eq.s32.totalorder %s23, 0
      %p241 = por %p239, %p240
      %p242 = scmp.ne.s32.totalorder %s234, %s236
      %p243 = scmp.eq.s32.totalorder %s28, 3
      %p244 = por %p242, %p243
      %p245 = scmp.ne.s32.totalorder %s236, %s237
      %p246 = scmp.eq.s32.totalorder %s28, 0
      %p247 = por %p245, %p246
      %p248 = scmp.ne.s32.totalorder %s236, %s237
      %p249 = scmp.eq.s32.totalorder %s29, 3
      %p250 = por %p248, %p249
      %p252 = scmp.ne.s32.totalorder %s237, %s251
      %p253 = scmp.eq.s32.totalorder %s29, 0
      %p254 = por %p252, %p253
      %s255 = ssub.s32 %s30, %s49
      %s256 = ssub.s32 %s31, %s45
      %s257 = sor.u32 %s255, %s256
      %p258 = scmp.eq.s32.totalorder %s257, 0
      %s260 = sadd.s32 %s259, 1
      %s261 = scalar_select %p258, %s259, %s260
      %p264 = pneg %p258
      %p265 = scmp.eq.s32.totalorder %s23, 3
      %p266 = por %p264, %p265
      %p267 = scmp.ne.s32.totalorder %s259, %s262
      %p268 = scmp.eq.s32.totalorder %s23, 0
      %p269 = por %p267, %p268
      %p270 = scmp.ne.s32.totalorder %s259, %s262
      %p271 = scmp.eq.s32.totalorder %s28, 3
      %p272 = por %p270, %p271
      %p273 = scmp.ne.s32.totalorder %s262, %s263
      %p274 = scmp.eq.s32.totalorder %s28, 0
      %p275 = por %p273, %p274
      %p276 = scmp.ne.s32.totalorder %s262, %s263
      %p277 = scmp.eq.s32.totalorder %s29, 3
      %p278 = por %p276, %p277
      %p280 = scmp.ne.s32.totalorder %s263, %s279
      %p281 = scmp.eq.s32.totalorder %s29, 0
      %p282 = por %p280, %p281
      %p283 = scmp.le.s32.totalorder 1, %s23
      %p284 = scmp.lt.s32.totalorder %s23, 5
      %p285 = pnand %p283, %p284
      %p286 = pneg %p285
      // Predicated region
      $region9: #{tpu_custom_call.1} parent=5 // pred_check
        _
      $region10: #{tpu_custom_call.1} parent=5 // pred_check_branch
        %288 = sbr.rel (%p285) target = $region12
      $region11: #{tpu_custom_call.1} parent=5 // pred_region
        %s289 = ssub.s32 %s23, 1
        // Predicated region
        $region13: #{tpu_custom_call.1} parent=11 // pred_check
          %p290 = pneg %p247
        $region14: #{tpu_custom_call.1} parent=11 // pred_check_branch
          %292 = sbr.rel (%p290) target = $region16
        $region15: #{tpu_custom_call.1} parent=11 // pred_region
          _
        $region16: #{tpu_custom_call.1} parent=11 // pred_fallthru
          _
      $region12: #{tpu_custom_call.1} parent=5 // pred_fallthru
        _
      %p293 = scmp.lt.s32.totalorder %s23, 4
      // Predicated region
      $region17: #{tpu_custom_call.1} parent=5 // pred_check
        %p294 = pneg %p293
      $region18: #{tpu_custom_call.1} parent=5 // pred_check_branch
        %296 = sbr.rel (%p294) target = $region20
      $region19: #{tpu_custom_call.1} parent=5 // pred_region
        // Predicated region
        $region21: #{tpu_custom_call.1} parent=19 // pred_check
          %p297 = pneg %p64
        $region22: #{tpu_custom_call.1} parent=19 // pred_check_branch
          %299 = sbr.rel (%p297) target = $region24
        $region23: #{tpu_custom_call.1} parent=19 // pred_region
          %s300 = sand.u32 %s54, 1
          %s301 = scalar_lea.sflag [#allocation3], %s300
          %s302 = sand.u32 %s54, 1
          %s303 = smul.addr %s302, 4
          %s304 = scalar_lea.vmem [#allocation2], %s303
          %306 = vsyncadd %s301, 0
          %s307 = sadd.s32 %s31, %s30
          %s308 = smul.addr %s307, 4
          %s309 = scalar_lea.hbm %s0, %s308
          %s311 = sshll.u32 %s309, 4
          %s312 = int_to_ptr.hbm [resolvable:$true] %s311
          %s313 = sshll.u32 %s304, 4
          %s314 = int_to_ptr.vmem [resolvable:$true] %s313
          %316 = dma.hbm_to_vmem [thread:$0]  %s312, 64, %s314, %s301
        $region24: #{tpu_custom_call.1} parent=19 // pred_fallthru
          _
        // Predicated region
        $region25: #{tpu_custom_call.1} parent=19 // pred_check
          %p317 = pneg %p90
        $region26: #{tpu_custom_call.1} parent=19 // pred_check_branch
          %319 = sbr.rel (%p317) target = $region28
        $region27: #{tpu_custom_call.1} parent=19 // pred_region
          %s320 = sand.u32 %s80, 1
          %s321 = scalar_lea.sflag [#allocation6], %s320
          %s322 = sand.u32 %s80, 1
          %s323 = smul.addr %s322, 4
          %s324 = scalar_lea.vmem [#allocation5], %s323
          %326 = vsyncadd %s321, 0
          %s327 = smul.addr %s30, 4
          %s328 = scalar_lea.hbm %s1, %s327
          %s330 = sshll.u32 %s328, 4
          %s331 = int_to_ptr.hbm [resolvable:$true] %s330
          %s332 = sshll.u32 %s324, 4
          %s333 = int_to_ptr.vmem [resolvable:$true] %s332
          %335 = dma.hbm_to_vmem [thread:$0]  %s331, 64, %s333, %s321
        $region28: #{tpu_custom_call.1} parent=19 // pred_fallthru
          _
        // Predicated region
        $region29: #{tpu_custom_call.1} parent=19 // pred_check
          %p336 = pneg %p116
        $region30: #{tpu_custom_call.1} parent=19 // pred_check_branch
          %338 = sbr.rel (%p336) target = $region32
        $region31: #{tpu_custom_call.1} parent=19 // pred_region
          %p339 = scmp.lt.s32.totalorder %s32, 1
          %s340 = scalar_select %p339, %s32, 1
          %s341 = smul.addr %s340, 4
          %s342 = smul.addr %s341, 4
          %s343 = scalar_lea.vmem %s2, %s342
        $region32: #{tpu_custom_call.1} parent=19 // pred_fallthru
          _
        // Predicated region
        $region33: #{tpu_custom_call.1} parent=19 // pred_check
          %p344 = pneg %p142
        $region34: #{tpu_custom_call.1} parent=19 // pred_check_branch
          %346 = sbr.rel (%p344) target = $region36
        $region35: #{tpu_custom_call.1} parent=19 // pred_region
          %p347 = scmp.lt.s32.totalorder %s32, 1
          %s348 = scalar_select %p347, %s32, 1
          %s349 = scalar_lea.vmem %s3, %s348
        $region36: #{tpu_custom_call.1} parent=19 // pred_fallthru
          _
        // Predicated region
        $region37: #{tpu_custom_call.1} parent=19 // pred_check
          %p350 = pneg %p168
        $region38: #{tpu_custom_call.1} parent=19 // pred_check_branch
          %352 = sbr.rel (%p350) target = $region40
        $region39: #{tpu_custom_call.1} parent=19 // pred_region
          %p353 = scmp.lt.s32.totalorder %s32, 1
          %s354 = scalar_select %p353, %s32, 1
          %s355 = smul.addr %s354, 4
          %s356 = smul.addr %s355, 4
          %s357 = scalar_lea.vmem %s4, %s356
        $region40: #{tpu_custom_call.1} parent=19 // pred_fallthru
          _
        // Predicated region
        $region41: #{tpu_custom_call.1} parent=19 // pred_check
          %p358 = pneg %p194
        $region42: #{tpu_custom_call.1} parent=19 // pred_check_branch
          %360 = sbr.rel (%p358) target = $region44
        $region43: #{tpu_custom_call.1} parent=19 // pred_region
          %p361 = scmp.lt.s32.totalorder %s32, 1
          %s362 = scalar_select %p361, %s32, 1
          %s363 = scalar_lea.vmem %s5, %s362
        $region44: #{tpu_custom_call.1} parent=19 // pred_fallthru
          _
        // Predicated region
        $region45: #{tpu_custom_call.1} parent=19 // pred_check
          %p364 = pneg %p220
        $region46: #{tpu_custom_call.1} parent=19 // pred_check_branch
          %366 = sbr.rel (%p364) target = $region48
        $region47: #{tpu_custom_call.1} parent=19 // pred_region
          %p367 = scmp.lt.s32.totalorder %s32, 1
          %s368 = scalar_select %p367, %s32, 1
          %s369 = smul.addr %s368, 2
          %s370 = smul.addr %s369, 4
          %s371 = scalar_lea.vmem %s6, %s370
        $region48: #{tpu_custom_call.1} parent=19 // pred_fallthru
          _
      $region20: #{tpu_custom_call.1} parent=5 // pred_fallthru
        _
      %p372 = scmp.le.s32.totalorder 1, %s23
      %p373 = scmp.lt.s32.totalorder %s23, 5
      %p374 = pnand %p372, %p373
      %p375 = pneg %p374
      // Predicated region
      $region49: #{tpu_custom_call.1} parent=5 // pred_check
        _
      $region50: #{tpu_custom_call.1} parent=5 // pred_check_branch
        %377 = sbr.rel (%p374) target = $region52
      $region51: #{tpu_custom_call.1} parent=5 // pred_region
        %s378 = ssub.s32 %s23, 1
        %s379 = sand.u32 %s57, 1
        %s380 = scalar_lea.sflag [#allocation3], %s379
        %s381 = sand.u32 %s57, 1
        %s382 = smul.addr %s381, 4
        %s383 = scalar_lea.vmem [#allocation2], %s382
        // Predicated region
        $region53: #{tpu_custom_call.1} parent=51 // pred_check
          %p384 = pneg %p70
        $region54: #{tpu_custom_call.1} parent=51 // pred_check_branch
          %386 = sbr.rel (%p384) target = $region56
        $region55: #{tpu_custom_call.1} parent=51 // pred_region
          %388 = dma.done %s380, 64
        $region56: #{tpu_custom_call.1} parent=51 // pred_fallthru
          _
        %s389 = sand.u32 %s83, 1
        %s390 = scalar_lea.sflag [#allocation6], %s389
        %s391 = sand.u32 %s83, 1
        %s392 = smul.addr %s391, 4
        %s393 = scalar_lea.vmem [#allocation5], %s392
        // Predicated region
        $region57: #{tpu_custom_call.1} parent=51 // pred_check
          %p394 = pneg %p96
        $region58: #{tpu_custom_call.1} parent=51 // pred_check_branch
          %396 = sbr.rel (%p394) target = $region60
        $region59: #{tpu_custom_call.1} parent=51 // pred_region
          %398 = dma.done %s390, 64
        $region60: #{tpu_custom_call.1} parent=51 // pred_fallthru
          _
        %s399 = sand.u32 %s57, 1
        %s400 = scalar_lea.sflag [#allocation3], %s399
        %s401 = sand.u32 %s57, 1
        %s402 = smul.addr %s401, 4
        %s403 = scalar_lea.vmem [#allocation2], %s402
        %p404 = pneg %p70
        %p405 = pneg %p67
        %s406 = sand.u32 %s83, 1
        %s407 = scalar_lea.sflag [#allocation6], %s406
        %s408 = sand.u32 %s83, 1
        %s409 = smul.addr %s408, 4
        %s410 = scalar_lea.vmem [#allocation5], %s409
        %p411 = pneg %p96
        %p412 = pneg %p93
        %p413 = scmp.lt.s32.totalorder %s35, 1
        %s414 = scalar_select %p413, %s35, 1
        %s415 = smul.addr %s414, 4
        %s416 = smul.addr %s415, 4
        %s417 = scalar_lea.vmem %s2, %s416
        %p418 = pneg %p122
        %p419 = pneg %p119
        %p420 = scmp.lt.s32.totalorder %s35, 1
        %s421 = scalar_select %p420, %s35, 1
        %s422 = scalar_lea.vmem %s3, %s421
        %p423 = pneg %p148
        %p424 = pneg %p145
        %p425 = scmp.lt.s32.totalorder %s35, 1
        %s426 = scalar_select %p425, %s35, 1
        %s427 = smul.addr %s426, 4
        %s428 = smul.addr %s427, 4
        %s429 = scalar_lea.vmem %s4, %s428
        %p430 = pneg %p174
        %p431 = pneg %p171
        %p432 = scmp.lt.s32.totalorder %s35, 1
        %s433 = scalar_select %p432, %s35, 1
        %s434 = scalar_lea.vmem %s5, %s433
        %p435 = pneg %p200
        %p436 = pneg %p197
        %p437 = scmp.lt.s32.totalorder %s35, 1
        %s438 = scalar_select %p437, %s35, 1
        %s439 = smul.addr %s438, 2
        %s440 = smul.addr %s439, 4
        %s441 = scalar_lea.vmem %s6, %s440
        %p442 = pneg %p226
        %p443 = pneg %p223
        %p444 = pneg %p247
        %p445 = pneg %p244
        %p446 = pneg %p275
        %p447 = pneg %p272
        %s448 = sand.u32 %s262, 1
        %s449 = scalar_lea.sflag [#allocation4], %s448
        %s450 = sand.u32 %s262, 1
        %s451 = smul.addr %s450, 8
        %s452 = scalar_lea.vmem [#allocation7], %s451
        %p453 = scmp.lt.s32.totalorder %s35, 1
        %s454 = scalar_select %p453, %s35, 1
        %s455 = smul.addr %s454, 4
        %s456 = smul.addr %s455, 4
        %s457 = scalar_lea.vmem %s2, %s456
        %p458 = scmp.lt.s32.totalorder %s35, 1
        %s459 = scalar_select %p458, %s35, 1
        %s460 = scalar_lea.vmem %s3, %s459
        %p461 = scmp.lt.s32.totalorder %s35, 1
        %s462 = scalar_select %p461, %s35, 1
        %s463 = smul.addr %s462, 4
        %s464 = smul.addr %s463, 4
        %s465 = scalar_lea.vmem %s4, %s464
        %p466 = scmp.lt.s32.totalorder %s35, 1
        %s467 = scalar_select %p466, %s35, 1
        %s468 = scalar_lea.vmem %s5, %s467
        %p469 = scmp.lt.s32.totalorder %s35, 1
        %s470 = scalar_select %p469, %s35, 1
        %s471 = smul.addr %s470, 2
        %s472 = smul.addr %s471, 4
        %s473 = scalar_lea.vmem %s6, %s472
        %v475 = vld [vmem:[%s383] sm:$0xf]
        %v476 = vld [vmem:[%s393] sm:$0xf]
        %p477 = scmp.eq.s32.totalorder %s35, 0
        // Predicated region
        $region61: #{tpu_custom_call.1} parent=51 // pred_check
          %p478 = pneg %p477
        $region62: #{tpu_custom_call.1} parent=51 // pred_check_branch
          %480 = sbr.rel (%p478) target = $region64
        $region63: #{tpu_custom_call.1} parent=51 // pred_region
          %v481 = vld [vmem:[%s7] sm:$0x1]
          %v483 = vperm.slane %v481, 0
          %vm485 = vcmask 261120
          %486 = vst.msk [vmem:[%s452] sm:$0xff] %vm485, %v483
        $region64: #{tpu_custom_call.1} parent=51 // pred_fallthru
          _
        %v487 = vld [vmem:[%s457] sm:$0xf]
        %v488 = vld [vmem:[%s457 + $0x4] sm:$0xf]
        %v489 = vld [vmem:[%s457 + $0x8] sm:$0xf]
        %v490 = vld [vmem:[%s457 + $0xc] sm:$0xf]
        %v491 = vld [vmem:[%s460] sm:$0x1]
        %v493 = vperm.slane %v491, 0
        %v499 = vunpack.c.l.b16 %v487
        %v500 = vunpack.c.l.b16 %v488
        %v501 = vunpack.c.l.b16 %v489
        %v502 = vunpack.c.l.b16 %v490
        %v503 = vpack.c.b16 %v500, %v499
        %v504 = vpack.c.b16 %v502, %v501
        %vm507 = vcmask 261120
        %v509 = vsel %vm507, %v475, 0
        %511 = vmatpush.bf16.msra.mxu0 0
        %512 = vmatpush.bf16.msra.mxu0 0
        %513 = vmatpush.bf16.msra.mxu0 0
        %514 = vmatpush.bf16.msra.mxu0 0
        %515 = vmatpush.bf16.msra.mxu0 0
        %516 = vmatpush.bf16.msra.mxu0 0
        %517 = vmatpush.bf16.msra.mxu0 %v504
        %518 = vmatpush.bf16.msra.mxu0 %v503
        %519 = vmatmul.bf16.gmra.mxu0 %v509
        %v520 = vpop.f32.mrf.mxu0
        %v521 = vadd.f32 %v493, %v520
        %v522 = vpop.f32.mrf.mxu0
        %523 = vdwg.mxu0
        %v524 = vld [vmem:[%s465] sm:$0xf]
        %v525 = vld [vmem:[%s465 + $0x4] sm:$0xf]
        %v526 = vld [vmem:[%s465 + $0x8] sm:$0xf]
        %v527 = vld [vmem:[%s465 + $0xc] sm:$0xf]
        %v528 = vld [vmem:[%s468] sm:$0x1]
        %v530 = vperm.slane %v528, 0
        %v536 = vunpack.c.l.b16 %v524
        %v537 = vunpack.c.l.b16 %v525
        %v538 = vunpack.c.l.b16 %v526
        %v539 = vunpack.c.l.b16 %v527
        %v540 = vpack.c.b16 %v537, %v536
        %v541 = vpack.c.b16 %v539, %v538
        %v545 = vsel %vm507, %v476, 0
        %547 = vmatpush.bf16.msra.mxu0 0
        %548 = vmatpush.bf16.msra.mxu0 0
        %549 = vmatpush.bf16.msra.mxu0 0
        %550 = vmatpush.bf16.msra.mxu0 0
        %551 = vmatpush.bf16.msra.mxu0 0
        %552 = vmatpush.bf16.msra.mxu0 0
        %553 = vmatpush.bf16.msra.mxu0 %v541
        %554 = vmatpush.bf16.msra.mxu0 %v540
        %555 = vmatmul.bf16.gmra.mxu0 %v545
        %v556 = vpop.f32.mrf.mxu0
        %v557 = vadd.f32 %v530, %v556
        %v558 = vpop.f32.mrf.mxu0
        %559 = vdwg.mxu0
        %v560 = vpack.c.bf16 %v521, %v521
        %v561 = vpack.c.bf16 %v557, %v557
        %v562 = vld [vmem:[%s473] sm:$0xf]
        %v563 = vld [vmem:[%s473 + $0x4] sm:$0xf]
        %vm564 = vcmask 64512
        %v566 = vsel %vm564, %v560, 0
        %v569 = vsel %vm564, %v561, 0
        %571 = vmatpush.bf16.xpose.msra.mxu0 0
        %572 = vmatpush.bf16.xpose.msra.mxu0 0
        %573 = vmatpush.bf16.xpose.msra.mxu0 0
        %574 = vmatpush.bf16.xpose.msra.mxu0 0
        %575 = vmatpush.bf16.xpose.msra.mxu0 0
        %576 = vmatpush.bf16.xpose.msra.mxu0 0
        %577 = vmatpush.bf16.xpose.msra.mxu0 0
        %578 = vmatpush.bf16.xpose.msra.mxu0 %v569
        %579 = vmatmul.bf16.gmra.mxu0 %v566
        %v580 = vpop.f32.mrf.mxu0
        %v581 = vadd.f32 0.0, %v580
        %v582 = vpop.f32.mrf.mxu0
        %583 = vdwg.mxu0
        %v584 = vsel %vm564, %v581, -inf
        %585 = vmax.xlane.f32.xlu0 %v584
        %v586 = vpop.xlane.xlu0 %585
        %v587 = vsub.f32 %v581, %v586
        %v588 = vmul.f32 %v587, 1.442695
        %v589 = vpow.pop %v588
        %v590 = vsel %vm564, %v589, 0.0
        %591 = vadd.xlane.f32.xlu0 %v590
        %v592 = vpop.xlane.xlu0 %591
        %v593 = vpack.c.bf16 %v589, %v589
        %v595 = vunpack.c.l.b16 %v561
        %v596 = vpack.c.b16 %v595, %v595
        %597 = vrot.lane.b32.xlu0 %v596, 112
        %v598 = vpop.permute.xlu0 %597
        %v600 = vsel %vm564, %v593, 0
        %vm602 = vcmask 1043456
        %v604 = vsel %vm602, %v598, 0
        %606 = vmatpush.bf16.msra.mxu0 0
        %607 = vmatpush.bf16.msra.mxu0 0
        %608 = vmatpush.bf16.msra.mxu0 0
        %609 = vmatpush.bf16.msra.mxu0 0
        %610 = vmatpush.bf16.msra.mxu0 0
        %611 = vmatpush.bf16.msra.mxu0 0
        %612 = vmatpush.bf16.msra.mxu0 0
        %613 = vmatpush.bf16.msra.mxu0 %v604
        %614 = vmatmul.bf16.gmra.mxu0 %v600
        %v615 = vpop.f32.mrf.mxu0
        %v616 = vadd.f32 0.0, %v615
        %v617 = vpop.f32.mrf.mxu0
        %618 = vdwg.mxu0
        %v619 = vrcp.pop %v592
        %v620 = vmul.f32 %v616, %v619
        %v621 = vpack.c.bf16 %v620, %v620
        %v623 = vunpack.c.l.b16 %v560
        %v624 = vpack.c.b16 %v623, %v623
        %625 = vrot.lane.b32.xlu0 %v624, 120
        %v626 = vpop.permute.xlu0 %625
        %627 = vrot.lane.b32.xlu0 %v596, 120
        %v628 = vpop.permute.xlu0 %627
        %v630 = vsel %vm564, %v626, 0
        %v633 = vsel %vm564, %v628, 0
        %635 = vmatpush.bf16.xpose.msra.mxu0 0
        %636 = vmatpush.bf16.xpose.msra.mxu0 0
        %637 = vmatpush.bf16.xpose.msra.mxu0 0
        %638 = vmatpush.bf16.xpose.msra.mxu0 0
        %639 = vmatpush.bf16.xpose.msra.mxu0 0
        %640 = vmatpush.bf16.xpose.msra.mxu0 0
        %641 = vmatpush.bf16.xpose.msra.mxu0 0
        %642 = vmatpush.bf16.xpose.msra.mxu0 %v633
        %643 = vmatmul.bf16.gmra.mxu0 %v630
        %v644 = vpop.f32.mrf.mxu0
        %v645 = vadd.f32 0.0, %v644
        %v646 = vpop.f32.mrf.mxu0
        %647 = vdwg.mxu0
        %v648 = vsel %vm564, %v645, -inf
        %649 = vmax.xlane.f32.xlu0 %v648
        %v650 = vpop.xlane.xlu0 %649
        %v651 = vsub.f32 %v645, %v650
        %v652 = vmul.f32 %v651, 1.442695
        %v653 = vpow.pop %v652
        %v654 = vsel %vm564, %v653, 0.0
        %655 = vadd.xlane.f32.xlu0 %v654
        %v656 = vpop.xlane.xlu0 %655
        %v657 = vpack.c.bf16 %v653, %v653
        %658 = vrot.lane.b32.xlu0 %v596, 104
        %v659 = vpop.permute.xlu0 %658
        %v661 = vsel %vm564, %v657, 0
        %v664 = vsel %vm602, %v659, 0
        %666 = vmatpush.bf16.msra.mxu0 0
        %667 = vmatpush.bf16.msra.mxu0 0
        %668 = vmatpush.bf16.msra.mxu0 0
        %669 = vmatpush.bf16.msra.mxu0 0
        %670 = vmatpush.bf16.msra.mxu0 0
        %671 = vmatpush.bf16.msra.mxu0 0
        %672 = vmatpush.bf16.msra.mxu0 0
        %673 = vmatpush.bf16.msra.mxu0 %v664
        %674 = vmatmul.bf16.gmra.mxu0 %v661
        %v675 = vpop.f32.mrf.mxu0
        %v676 = vadd.f32 0.0, %v675
        %v677 = vpop.f32.mrf.mxu0
        %678 = vdwg.mxu0
        %v679 = vrcp.pop %v656
        %v680 = vmul.f32 %v676, %v679
        %v681 = vpack.c.bf16 %v680, %v680
        %v683 = vsel %vm564, %v681, 0
        %v686 = vsel %vm602, %v563, 0
        %688 = vmatpush.bf16.msra.mxu0 0
        %689 = vmatpush.bf16.msra.mxu0 0
        %690 = vmatpush.bf16.msra.mxu0 0
        %691 = vmatpush.bf16.msra.mxu0 0
        %692 = vmatpush.bf16.msra.mxu0 0
        %693 = vmatpush.bf16.msra.mxu0 0
        %694 = vmatpush.bf16.msra.mxu0 0
        %695 = vmatpush.bf16.msra.mxu0 %v686
        %696 = vmatmul.bf16.gmra.mxu0 %v683
        %v697 = vpop.f32.mrf.mxu0
        %v698 = vadd.f32 0.0, %v697
        %v699 = vpop.f32.mrf.mxu0
        %700 = vdwg.mxu0
        %v702 = vsel %vm564, %v621, 0
        %v705 = vsel %vm602, %v562, 0
        %707 = vmatpush.bf16.msra.mxu0 0
        %708 = vmatpush.bf16.msra.mxu0 0
        %709 = vmatpush.bf16.msra.mxu0 0
        %710 = vmatpush.bf16.msra.mxu0 0
        %711 = vmatpush.bf16.msra.mxu0 0
        %712 = vmatpush.bf16.msra.mxu0 0
        %713 = vmatpush.bf16.msra.mxu0 0
        %714 = vmatpush.bf16.msra.mxu0 %v705
        %715 = vmatmul.bf16.gmra.mxu0 %v702
        %v716 = vpop.f32.mrf.mxu0
        %v717 = vadd.f32 %v698, %v716
        %v718 = vpop.f32.mrf.mxu0
        %719 = vdwg.mxu0
        %v720 = vld [vmem:[%s452] sm:$0xff]
        %v721 = vadd.f32 %v720, %v717
        %722 = vst.msk [vmem:[%s452] sm:$0xff] %vm507, %v721
        %s723 = sand.u32 %s262, 1
        %s724 = scalar_lea.sflag [#allocation4], %s723
        %s725 = sand.u32 %s262, 1
        %s726 = smul.addr %s725, 8
        %s727 = scalar_lea.vmem [#allocation7], %s726
        // Predicated region
        $region65: #{tpu_custom_call.1} parent=51 // pred_check
          %p728 = pneg %p272
        $region66: #{tpu_custom_call.1} parent=51 // pred_check_branch
          %730 = sbr.rel (%p728) target = $region68
        $region67: #{tpu_custom_call.1} parent=51 // pred_region
          %732 = vsyncadd %s724, 0
          %s733 = sadd.s32 %s34, %s33
          %s734 = smul.addr %s733, 8
          %s735 = scalar_lea.hbm %s8, %s734
          %s737 = sshll.u32 %s727, 4
          %s738 = int_to_ptr.vmem [resolvable:$true] %s737
          %s739 = sshll.u32 %s735, 4
          %s740 = int_to_ptr.hbm [resolvable:$true] %s739
          %742 = dma.vmem_to_hbm [thread:$0]  %s738, 128, %s740, %s724
        $region68: #{tpu_custom_call.1} parent=51 // pred_fallthru
          _
      $region52: #{tpu_custom_call.1} parent=5 // pred_fallthru
        _
      %p743 = scmp.le.s32.totalorder 2, %s23
      // Predicated region
      $region69: #{tpu_custom_call.1} parent=5 // pred_check
        %p744 = pneg %p743
      $region70: #{tpu_custom_call.1} parent=5 // pred_check_branch
        %746 = sbr.rel (%p744) target = $region72
      $region71: #{tpu_custom_call.1} parent=5 // pred_region
        %s747 = ssub.s32 %s23, 2
        // Predicated region
        $region73: #{tpu_custom_call.1} parent=71 // pred_check
          %p748 = pneg %p278
        $region74: #{tpu_custom_call.1} parent=71 // pred_check_branch
          %750 = sbr.rel (%p748) target = $region76
        $region75: #{tpu_custom_call.1} parent=71 // pred_region
          %s751 = sand.u32 %s263, 1
          %s752 = scalar_lea.sflag [#allocation4], %s751
          %s753 = sand.u32 %s263, 1
          %s754 = smul.addr %s753, 8
          %s755 = scalar_lea.vmem [#allocation7], %s754
          %757 = dma.done %s752, 128
        $region76: #{tpu_custom_call.1} parent=71 // pred_fallthru
          _
      $region72: #{tpu_custom_call.1} parent=5 // pred_fallthru
        _
    $region6: #{tpu_custom_call.1} parent=1 // loop_footer
      %s27 = sadd.s32 1, %s23
    $region7: #{tpu_custom_call.1} parent=1 // loop_footer_branch
      %22 = sbr.rel target = $region3
    $region8: #{tpu_custom_call.1} parent=1 // loop_exit
      _
    %758 = vsyncpa [#allocation3], 1
    %s759 = scalar_lea.sflag [#allocation3], 1
    %760 = vsyncpa %s759, 1
    %761 = vsyncpa [#allocation6], 1
    %s762 = scalar_lea.sflag [#allocation6], 1
    %763 = vsyncpa %s762, 1
    %764 = vsyncpa [#allocation4], 1
    %s765 = scalar_lea.sflag [#allocation4], 1
    %766 = vsyncpa %s765, 1

</llo_original>
